<compile_context>
chip_gen: v5e
topology: v5e:2x2
jax: 0.10.0
libtpu: 0.0.40
codegen_flags: <defaults>
</compile_context>

<pallas_src>
import jax
import jax.numpy as jnp
from jax.experimental import pallas as pl
from jax.experimental.pallas import tpu as pltpu

INPUT_SIZE = 4
HIDDEN_SIZE = 128
OUTPUT_SIZE = 12


def _round_up(n, m):
    return ((n + m - 1) // m) * m


def mlp_kernel(x_ref, w1_ref, b1_ref, w2_ref, b2_ref, o_ref):
    # x:  (tb, 4) f32     w1: (4, 128) f32   b1: (1, 128) f32
    # w2: (128, 12) bf16  b2: (1, 12) f32    o:  (tb, 12) f32
    x = x_ref[...]
    w1 = w1_ref[...]
    tb = x.shape[0]

    # fc1 as 4 VPU rank-1 broadcast-multiply-adds; bias folded into the
    # accumulator init.  (A K=4 MXU dot would pay full fill/drain for <4%
    # utilization; the XLU lane-broadcasts here are free filler while the
    # kernel waits on HBM.)
    h = jnp.broadcast_to(b1_ref[...], (tb, HIDDEN_SIZE))
    for k in range(INPUT_SIZE):               # static 4-way unroll
        h = h + x[:, k:k + 1] * w1[k:k + 1, :]
    h = jnp.maximum(h, 0.0)                   # ReLU

    # fc2 on the MXU: bf16 operands, f32 accumulation.  The narrow 12-wide
    # result is stored directly into the (tb, 12) output block (masked vst).
    y = jnp.dot(h.astype(jnp.bfloat16), w2_ref[...],
                preferred_element_type=jnp.float32)
    o_ref[...] = (y + b2_ref[...]).astype(o_ref.dtype)


def _choose_batch_tile(B, tile_b):
    """Sublane-aligned batch tile with low pad waste; keep >=2-4 grid steps
    when the batch allows so the 'parallel' axis uses both v7x TCs."""
    b8 = _round_up(max(B, 1), 8)
    n_steps = max(pl.cdiv(b8, tile_b), min(4, b8 // 8), 1)
    tb = _round_up(pl.cdiv(b8, n_steps), 8)
    b_pad = tb * pl.cdiv(b8, tb)
    return tb, b_pad


def mlp_forward(x, w1, b1, w2, b2, *, tile_b=2048):
    B = x.shape[0]
    tb, b_pad = _choose_batch_tile(B, tile_b)
    if b_pad != B:
        x = jnp.pad(x, ((0, b_pad - B), (0, 0)))

    # fc2 weights cast to bf16 once (MXU is bf16-native on v5e/v6e/v7x).
    w2_bf16 = w2.astype(jnp.bfloat16)

    grid = (b_pad // tb,)

    # Per-grid-step VMEM budget (blocks are double-buffered):
    #   x block   (tb, 4)  f32 lane-pads to (tb, 128) -> tb*512 B  x2 buffers
    #   out block (tb, 12) f32 lane-pads to (tb, 128) -> tb*512 B  x2 buffers
    #   h / y temps ~ tb*1 KiB; resident weights/biases < 128 KiB.
    vmem_est = 2 * (tb * 512) * 2 + tb * 1024 + (1 << 20)
    vmem_limit = int(min(max(int(vmem_est * 3 // 2), 16 << 20), 48 << 20))

    flops = 2 * b_pad * (INPUT_SIZE * HIDDEN_SIZE + HIDDEN_SIZE * OUTPUT_SIZE)
    bytes_accessed = (4 * b_pad * INPUT_SIZE
                      + 4 * (w1.size + b1.size + b2.size)
                      + 2 * w2_bf16.size
                      + 4 * b_pad * OUTPUT_SIZE)

    out = pl.pallas_call(
        mlp_kernel,
        out_shape=jax.ShapeDtypeStruct((b_pad, OUTPUT_SIZE), jnp.float32),
        grid_spec=pltpu.PrefetchScalarGridSpec(
            num_scalar_prefetch=0,
            grid=grid,
            in_specs=[
                pl.BlockSpec((tb, INPUT_SIZE), lambda i: (i, 0)),            # x streams
                pl.BlockSpec((INPUT_SIZE, HIDDEN_SIZE), lambda i: (0, 0)),   # resident
                pl.BlockSpec((1, HIDDEN_SIZE), lambda i: (0, 0)),            # resident
                pl.BlockSpec((HIDDEN_SIZE, OUTPUT_SIZE), lambda i: (0, 0)),  # resident
                pl.BlockSpec((1, OUTPUT_SIZE), lambda i: (0, 0)),            # resident
            ],
            out_specs=pl.BlockSpec((tb, OUTPUT_SIZE), lambda i: (i, 0)),
        ),
        compiler_params=pltpu.CompilerParams(
            dimension_semantics=("parallel",),   # batch tiles across TCs (v7x)
            vmem_limit_bytes=vmem_limit,
        ),
        cost_estimate=pl.CostEstimate(
            flops=flops, transcendentals=0, bytes_accessed=bytes_accessed),
    )(x, w1, b1, w2_bf16, b2)

    # Only the batch padding (if any) is sliced off; output width is already 12.
    return out if b_pad == B else out[:B]


def init_params(key):
    # Mimics nn.Linear's U(-1/sqrt(fan_in), 1/sqrt(fan_in)) init; weights are
    # stored pre-transposed as (in, out) so x @ W matches PyTorch's x @ W.T.
    k1, k2, k3, k4 = jax.random.split(key, 4)
    bound1 = 1.0 / jnp.sqrt(INPUT_SIZE)
    bound2 = 1.0 / jnp.sqrt(HIDDEN_SIZE)
    w1 = jax.random.uniform(k1, (INPUT_SIZE, HIDDEN_SIZE), jnp.float32,
                            -bound1, bound1)
    b1 = jax.random.uniform(k2, (1, HIDDEN_SIZE), jnp.float32, -bound1, bound1)
    w2 = jax.random.uniform(k3, (HIDDEN_SIZE, OUTPUT_SIZE), jnp.float32,
                            -bound2, bound2)
    b2 = jax.random.uniform(k4, (1, OUTPUT_SIZE), jnp.float32, -bound2, bound2)
    return w1, b1, w2, b2


if __name__ == "__main__":
    key = jax.random.PRNGKey(0)
    kx, kp = jax.random.split(key)

    batch = 8
    x = jax.random.normal(kx, (batch, INPUT_SIZE), jnp.float32)
    w1, b1, w2, b2 = init_params(kp)

    out = mlp_forward(x, w1, b1, w2, b2)
    out = jax.block_until_ready(out)

    # Reference check in plain f32 JAX (same semantics as the PyTorch
    # forward).  Tolerance is loosened because fc2 runs in bf16 on the MXU.
    ref = jnp.maximum(x @ w1 + b1, 0.0) @ w2 + b2
    assert out.shape == (batch, OUTPUT_SIZE)
    assert jnp.allclose(out, ref, atol=3e-2, rtol=3e-2), \
        float(jnp.max(jnp.abs(out - ref)))

    # TODO(synk): l2_regularization() is a training-time penalty over the
    # parameters, not part of the forward pass; not implemented as a kernel.

    print("KERNEL_OK")
</pallas_src>

<mosaic_0001>
module attributes {stable_mosaic.version = 11 : i64} {
  func.func @mlp_kernel(%arg0: i32, %arg1: memref<8x4xf32, #tpu.memory_space<vmem>>, %arg2: memref<4x128xf32, #tpu.memory_space<vmem>>, %arg3: memref<1x128xf32, #tpu.memory_space<vmem>>, %arg4: memref<128x12xbf16, #tpu.memory_space<vmem>>, %arg5: memref<1x12xf32, #tpu.memory_space<vmem>>, %arg6: memref<8x12xf32, #tpu.memory_space<vmem>>) attributes {dimension_semantics = [#tpu.dimension_semantics<parallel>], iteration_bounds = array<i64: 1>, scalar_prefetch = 0 : i64, scratch_operands = 0 : i64, tpu.core_type = #tpu.core_type<tc>, window_params = [{transform_indices = @transform_0, window_bounds = array<i64: 8, 4>}, {pipeline_mode = #tpu.pipeline_mode<synchronous>, transform_indices = @transform_1, window_bounds = array<i64: 4, 128>}, {pipeline_mode = #tpu.pipeline_mode<synchronous>, transform_indices = @transform_2, window_bounds = array<i64: 1, 128>}, {pipeline_mode = #tpu.pipeline_mode<synchronous>, transform_indices = @transform_3, window_bounds = array<i64: 128, 12>}, {pipeline_mode = #tpu.pipeline_mode<synchronous>, transform_indices = @transform_4, window_bounds = array<i64: 1, 12>}, {transform_indices = @transform_5, window_bounds = array<i64: 8, 12>}]} {
    %c0 = arith.constant 0 : index
    %c0_0 = arith.constant 0 : index
    %0 = vector.load %arg1[%c0, %c0_0] : memref<8x4xf32, #tpu.memory_space<vmem>>, vector<8x4xf32>
    %c0_1 = arith.constant 0 : index
    %c0_2 = arith.constant 0 : index
    %1 = vector.load %arg2[%c0_1, %c0_2] : memref<4x128xf32, #tpu.memory_space<vmem>>, vector<4x128xf32>
    %c0_3 = arith.constant 0 : index
    %c0_4 = arith.constant 0 : index
    %2 = vector.load %arg3[%c0_3, %c0_4] : memref<1x128xf32, #tpu.memory_space<vmem>>, vector<1x128xf32>
    %3 = vector.shape_cast %2 : vector<1x128xf32> to vector<1x128xf32>
    %4 = vector.broadcast %3 : vector<1x128xf32> to vector<8x128xf32>
    %5 = vector.extract_strided_slice %0 {offsets = [0, 0], sizes = [8, 1], strides = [1, 1]} : vector<8x4xf32> to vector<8x1xf32>
    %6 = vector.extract_strided_slice %1 {offsets = [0, 0], sizes = [1, 128], strides = [1, 1]} : vector<4x128xf32> to vector<1x128xf32>
    %7 = vector.broadcast %5 : vector<8x1xf32> to vector<8x128xf32>
    %8 = vector.broadcast %6 : vector<1x128xf32> to vector<8x128xf32>
    %9 = arith.mulf %7, %8 : vector<8x128xf32>
    %10 = arith.addf %4, %9 : vector<8x128xf32>
    %11 = vector.extract_strided_slice %0 {offsets = [0, 1], sizes = [8, 1], strides = [1, 1]} : vector<8x4xf32> to vector<8x1xf32>
    %12 = vector.extract_strided_slice %1 {offsets = [1, 0], sizes = [1, 128], strides = [1, 1]} : vector<4x128xf32> to vector<1x128xf32>
    %13 = vector.broadcast %11 : vector<8x1xf32> to vector<8x128xf32>
    %14 = vector.broadcast %12 : vector<1x128xf32> to vector<8x128xf32>
    %15 = arith.mulf %13, %14 : vector<8x128xf32>
    %16 = arith.addf %10, %15 : vector<8x128xf32>
    %17 = vector.extract_strided_slice %0 {offsets = [0, 2], sizes = [8, 1], strides = [1, 1]} : vector<8x4xf32> to vector<8x1xf32>
    %18 = vector.extract_strided_slice %1 {offsets = [2, 0], sizes = [1, 128], strides = [1, 1]} : vector<4x128xf32> to vector<1x128xf32>
    %19 = vector.broadcast %17 : vector<8x1xf32> to vector<8x128xf32>
    %20 = vector.broadcast %18 : vector<1x128xf32> to vector<8x128xf32>
    %21 = arith.mulf %19, %20 : vector<8x128xf32>
    %22 = arith.addf %16, %21 : vector<8x128xf32>
    %23 = vector.extract_strided_slice %0 {offsets = [0, 3], sizes = [8, 1], strides = [1, 1]} : vector<8x4xf32> to vector<8x1xf32>
    %24 = vector.extract_strided_slice %1 {offsets = [3, 0], sizes = [1, 128], strides = [1, 1]} : vector<4x128xf32> to vector<1x128xf32>
    %25 = vector.broadcast %23 : vector<8x1xf32> to vector<8x128xf32>
    %26 = vector.broadcast %24 : vector<1x128xf32> to vector<8x128xf32>
    %27 = arith.mulf %25, %26 : vector<8x128xf32>
    %28 = arith.addf %22, %27 : vector<8x128xf32>
    %cst = arith.constant 0.000000e+00 : f32
    %29 = vector.broadcast %cst : f32 to vector<8x128xf32>
    %30 = arith.maximumf %28, %29 : vector<8x128xf32>
    %31 = arith.truncf %30 : vector<8x128xf32> to vector<8x128xbf16>
    %c0_5 = arith.constant 0 : index
    %c0_6 = arith.constant 0 : index
    %32 = vector.load %arg4[%c0_5, %c0_6] : memref<128x12xbf16, #tpu.memory_space<vmem>>, vector<128x12xbf16>
    %cst_7 = arith.constant dense<0.000000e+00> : vector<8x12xf32>
    %33 = tpu.matmul %31, %32, %cst_7 {dimension_numbers = #tpu.dot_dimension_numbers<[1], [0], [0], [1], [0, 0, 1, 1], [], []>} : vector<8x128xbf16>, vector<128x12xbf16>, vector<8x12xf32> -> vector<8x12xf32>
    %c0_8 = arith.constant 0 : index
    %c0_9 = arith.constant 0 : index
    %34 = vector.load %arg5[%c0_8, %c0_9] : memref<1x12xf32, #tpu.memory_space<vmem>>, vector<1x12xf32>
    %35 = vector.broadcast %34 : vector<1x12xf32> to vector<8x12xf32>
    %36 = arith.addf %33, %35 : vector<8x12xf32>
    %c0_10 = arith.constant 0 : index
    %c0_11 = arith.constant 0 : index
    %37 = vector.load %arg6[%c0_10, %c0_11] : memref<8x12xf32, #tpu.memory_space<vmem>>, vector<8x12xf32>
    tpu.vector_store %arg6[%c0_10, %c0_11], %36 {strides = array<i32>} : memref<8x12xf32, #tpu.memory_space<vmem>>, vector<8x12xf32>,
    return
  }
  func.func @transform_0(%arg0: i32) -> (i32, i32) {
    %c0_i32 = arith.constant 0 : i32
    %c0_i32_0 = arith.constant 0 : i32
    return %arg0, %c0_i32 : i32, i32
  }
  func.func @transform_1(%arg0: i32) -> (i32, i32) {
    %c0_i32 = arith.constant 0 : i32
    %c0_i32_0 = arith.constant 0 : i32
    %c0_i32_1 = arith.constant 0 : i32
    return %c0_i32, %c0_i32_0 : i32, i32
  }
  func.func @transform_2(%arg0: i32) -> (i32, i32) {
    %c0_i32 = arith.constant 0 : i32
    %c0_i32_0 = arith.constant 0 : i32
    %c0_i32_1 = arith.constant 0 : i32
    return %c0_i32, %c0_i32_0 : i32, i32
  }
  func.func @transform_3(%arg0: i32) -> (i32, i32) {
    %c0_i32 = arith.constant 0 : i32
    %c0_i32_0 = arith.constant 0 : i32
    %c0_i32_1 = arith.constant 0 : i32
    return %c0_i32, %c0_i32_0 : i32, i32
  }
  func.func @transform_4(%arg0: i32) -> (i32, i32) {
    %c0_i32 = arith.constant 0 : i32
    %c0_i32_0 = arith.constant 0 : i32
    %c0_i32_1 = arith.constant 0 : i32
    return %c0_i32, %c0_i32_0 : i32, i32
  }
  func.func @transform_5(%arg0: i32) -> (i32, i32) {
    %c0_i32 = arith.constant 0 : i32
    %c0_i32_0 = arith.constant 0 : i32
    return %arg0, %c0_i32 : i32, i32
  }
}

</mosaic_0001>

<llo_original>
// kernel: tpu_custom_call.1
$region0: #{tpu_custom_call.1}
  #allocation0 [shape = 'u32[]', space=smem, size = 0x4, offset = 0x4, fixed_abs, tag = 'smem constant byte address 0x4 - core index']
  #allocation1 [shape = 'u32[72,128]{1,0:T(1,128)}', space=vmem, size = 0x9000, scoped, tag = 'internal scratch']
  %s0 = inlined_call_operand.vmem [shape: f32[8,4], index: 0, kind: input, shape index: {}]
  %s1 = inlined_call_operand.vmem [shape: f32[4,128], index: 1, kind: input, shape index: {}]
  %s2 = inlined_call_operand.vmem [shape: f32[1,128], index: 2, kind: input, shape index: {}]
  %s3 = inlined_call_operand.vmem [shape: bf16[128,12], index: 3, kind: input, shape index: {}]
  %s4 = inlined_call_operand.vmem [shape: f32[1,12], index: 4, kind: input, shape index: {}]
  %s5 = inlined_call_operand.hbm [shape: f32[8,12], index: 5, kind: output, shape index: {}]
  %s6 = sld [smem:[#allocation0]]
  $region30: #{tpu_custom_call.1} parent=0
    _
  %s8 = ssub.s32 1, %s6
  %s9 = scalar_select 0, %s8, %s6
  $region1: #{tpu_custom_call.1} parent=0
    #allocation2 [shape = 'u8[4096]{0}', space=vmem, size = 0x1000, scoped, tag = 'output window, operand 0, single buffered']
    #allocation3 [shape = 's32[1]{0}', space=sflag, size = 0x4, scoped, tag = 'scoped memory for tpu_custom_call.1']
    %10 = vsyncpa [#allocation3], 0
    // Predicated region
    $region2: #{tpu_custom_call.1} parent=1 // pred_check
      _
    $region3: #{tpu_custom_call.1} parent=1 // pred_check_branch
      %12 = sbr.rel (0) target = $region5
    $region4: #{tpu_custom_call.1} parent=1 // pred_region
      _
    $region5: #{tpu_custom_call.1} parent=1 // pred_fallthru
      _
    // Predicated region
    $region6: #{tpu_custom_call.1} parent=1 // pred_check
      _
    $region7: #{tpu_custom_call.1} parent=1 // pred_check_branch
      %14 = sbr.rel (0) target = $region9
    $region8: #{tpu_custom_call.1} parent=1 // pred_region
      _
    $region9: #{tpu_custom_call.1} parent=1 // pred_fallthru
      _
    // Predicated region
    $region10: #{tpu_custom_call.1} parent=1 // pred_check
      _
    $region11: #{tpu_custom_call.1} parent=1 // pred_check_branch
      %16 = sbr.rel (0) target = $region13
    $region12: #{tpu_custom_call.1} parent=1 // pred_region
      _
    $region13: #{tpu_custom_call.1} parent=1 // pred_fallthru
      _
    // Predicated region
    $region14: #{tpu_custom_call.1} parent=1 // pred_check
      _
    $region15: #{tpu_custom_call.1} parent=1 // pred_check_branch
      %18 = sbr.rel (0) target = $region17
    $region16: #{tpu_custom_call.1} parent=1 // pred_region
      _
    $region17: #{tpu_custom_call.1} parent=1 // pred_fallthru
      _
    // Predicated region
    $region18: #{tpu_custom_call.1} parent=1 // pred_check
      _
    $region19: #{tpu_custom_call.1} parent=1 // pred_check_branch
      %20 = sbr.rel (0) target = $region21
    $region20: #{tpu_custom_call.1} parent=1 // pred_region
      _
    $region21: #{tpu_custom_call.1} parent=1 // pred_fallthru
      _
    %v21 = vld [vmem:[%s0] sm:$0xff]
    %v22 = vld [vmem:[%s1] sm:$0xf]
    %v23 = vld [vmem:[%s2] sm:$0x1]
    %v25 = vperm.slane %v23, 0
    %28 = vset.pattern.permute.xlu0 0
    %29 = vperm.xlu0 %28, %v21
    %v30 = vpop.permute.xlu0 %29
    %v32 = vperm.slane %v22, 0
    %v33 = vmul.f32 %v30, %v32
    %v34 = vadd.f32 %v25, %v33
    %35 = vset.pattern.permute.xlu0 1
    %36 = vperm.xlu0 %35, %v21
    %v37 = vpop.permute.xlu0 %36
    %v39 = vperm.slane %v22, 1
    %v40 = vmul.f32 %v37, %v39
    %v41 = vadd.f32 %v34, %v40
    %42 = vset.pattern.permute.xlu0 2
    %43 = vperm.xlu0 %42, %v21
    %v44 = vpop.permute.xlu0 %43
    %v46 = vperm.slane %v22, 2
    %v47 = vmul.f32 %v44, %v46
    %v48 = vadd.f32 %v41, %v47
    %49 = vset.pattern.permute.xlu0 3
    %50 = vperm.xlu0 %49, %v21
    %v51 = vpop.permute.xlu0 %50
    %v53 = vperm.slane %v22, 3
    %v54 = vmul.f32 %v51, %v53
    %v55 = vadd.f32 %v48, %v54
    %v56 = vmax.f32 %v55, 0.0
    %v57 = vpack.c.bf16 %v56, %v56
    %v58 = vld [vmem:[%s3] sm:$0xf]
    %v59 = vld [vmem:[%s3 + $0x4] sm:$0xf]
    %v60 = vld [vmem:[%s3 + $0x8] sm:$0xf]
    %v61 = vld [vmem:[%s3 + $0xc] sm:$0xf]
    %v62 = vld [vmem:[%s3 + $0x10] sm:$0xf]
    %v63 = vld [vmem:[%s3 + $0x14] sm:$0xf]
    %v64 = vld [vmem:[%s3 + $0x18] sm:$0xf]
    %v65 = vld [vmem:[%s3 + $0x1c] sm:$0xf]
    %v66 = vld [vmem:[%s3 + $0x20] sm:$0xf]
    %v67 = vld [vmem:[%s3 + $0x24] sm:$0xf]
    %v68 = vld [vmem:[%s3 + $0x28] sm:$0xf]
    %v69 = vld [vmem:[%s3 + $0x2c] sm:$0xf]
    %v70 = vld [vmem:[%s3 + $0x30] sm:$0xf]
    %v71 = vld [vmem:[%s3 + $0x34] sm:$0xf]
    %v72 = vld [vmem:[%s3 + $0x38] sm:$0xf]
    %v73 = vld [vmem:[%s3 + $0x3c] sm:$0xf]
    %v74 = vld [vmem:[%s4] sm:$0x1]
    %v76 = vperm.slane %v74, 0
    %v94 = vunpack.c.l.b16 %v58
    %v95 = vunpack.c.l.b16 %v59
    %v96 = vunpack.c.l.b16 %v60
    %v97 = vunpack.c.l.b16 %v61
    %v98 = vunpack.c.l.b16 %v62
    %v99 = vunpack.c.l.b16 %v63
    %v100 = vunpack.c.l.b16 %v64
    %v101 = vunpack.c.l.b16 %v65
    %v102 = vunpack.c.l.b16 %v66
    %v103 = vunpack.c.l.b16 %v67
    %v104 = vunpack.c.l.b16 %v68
    %v105 = vunpack.c.l.b16 %v69
    %v106 = vunpack.c.l.b16 %v70
    %v107 = vunpack.c.l.b16 %v71
    %v108 = vunpack.c.l.b16 %v72
    %v109 = vunpack.c.l.b16 %v73
    %v110 = vpack.c.b16 %v95, %v94
    %v111 = vpack.c.b16 %v97, %v96
    %v112 = vpack.c.b16 %v99, %v98
    %v113 = vpack.c.b16 %v101, %v100
    %v114 = vpack.c.b16 %v103, %v102
    %v115 = vpack.c.b16 %v105, %v104
    %v116 = vpack.c.b16 %v107, %v106
    %v117 = vpack.c.b16 %v109, %v108
    %126 = vmatpush.bf16.msra.mxu0 %v117
    %127 = vmatpush.bf16.msra.mxu0 %v116
    %128 = vmatpush.bf16.msra.mxu0 %v115
    %129 = vmatpush.bf16.msra.mxu0 %v114
    %130 = vmatpush.bf16.msra.mxu0 %v113
    %131 = vmatpush.bf16.msra.mxu0 %v112
    %132 = vmatpush.bf16.msra.mxu0 %v111
    %133 = vmatpush.bf16.msra.mxu0 %v110
    %134 = vmatmul.bf16.gmra.mxu0 %v57
    %v135 = vpop.f32.mrf.mxu0
    %v136 = vadd.f32 %v76, %v135
    %v137 = vpop.f32.mrf.mxu0
    %138 = vdwg.mxu0
    %vm139 = vcmask 97280
    %140 = vst.msk [vmem:[#allocation2] sm:$0xff] %vm139, %v136
    // Predicated region
    $region22: #{tpu_custom_call.1} parent=1 // pred_check
      _
    $region23: #{tpu_custom_call.1} parent=1 // pred_check_branch
      %142 = sbr.rel (0) target = $region25
    $region24: #{tpu_custom_call.1} parent=1 // pred_region
      %144 = vsyncadd [#allocation3], 0
      %s146 = sshll.u32 [#allocation2], 4
      %s147 = int_to_ptr.vmem [resolvable:$true] %s146
      %s148 = sshll.u32 %s5, 4
      %s149 = int_to_ptr.hbm [resolvable:$true] %s148
      %151 = dma.vmem_to_hbm [thread:$0]  %s147, 128, %s149, [#allocation3]
    $region25: #{tpu_custom_call.1} parent=1 // pred_fallthru
      _
    // Predicated region
    $region26: #{tpu_custom_call.1} parent=1 // pred_check
      _
    $region27: #{tpu_custom_call.1} parent=1 // pred_check_branch
      %153 = sbr.rel (0) target = $region29
    $region28: #{tpu_custom_call.1} parent=1 // pred_region
      %155 = dma.done [#allocation3], 128
    $region29: #{tpu_custom_call.1} parent=1 // pred_fallthru
      _
    %156 = vsyncpa [#allocation3], 1

</llo_original>
